<compile_context>
chip_gen: v7x
topology: tpu7x:2x2x1
jax: 0.10.0
libtpu: 0.0.40
codegen_flags: <defaults>
</compile_context>

<pallas_src>
import functools

import jax
import jax.numpy as jnp
from jax.experimental import pallas as pl
from jax.experimental.pallas import tpu as pltpu


def _sym_decoder_kernel(x_ref, w1_ref, b1_ref, w2_ref, b2_ref,
                        sg_ref, sp_ref, *, fo, act_dtype):
    # Layer 1: cast x -> bf16 on the VPU (in-kernel, no extra HBM pass),
    # MXU matmul with f32 accumulation, f32 bias add.
    x = x_ref[...].astype(w1_ref.dtype)
    h = jnp.dot(x, w1_ref[...], preferred_element_type=jnp.float32)
    h = jnp.tanh((h + b1_ref[...]).astype(act_dtype))

    # Fused heads: single [TB, H] @ [H, Fo+S] matmul + bias + tanh.
    z = jnp.dot(h.astype(w2_ref.dtype), w2_ref[...],
                preferred_element_type=jnp.float32)
    z = jnp.tanh((z + b2_ref[...]).astype(act_dtype))

    # Split the fused result back into the two heads (static slices).
    sg_ref[...] = z[:, :fo].astype(sg_ref.dtype)
    sp_ref[...] = z[:, fo:].astype(sp_ref.dtype)


def _default_act_dtype():
    """bf16 tanh where the VPU/EUP supports it; f32 on older chips."""
    try:
        kind = jax.devices()[0].device_kind.lower()
    except Exception:  # pragma: no cover - defensive
        return jnp.float32
    if any(tag in kind for tag in ("v2", "v3", "v4", "v5")):
        return jnp.float32
    return jnp.bfloat16


@functools.partial(jax.jit, static_argnames=("block_rows", "act_dtype"))
def _sym_decoder_impl(x, w1, b1, wsg, bsg, wsp, bsp, *, block_rows, act_dtype):
    B, F = x.shape
    H = w1.shape[1]
    Fo = wsg.shape[1]
    S = wsp.shape[1]

    # Fuse the two head weights/biases (tiny arrays; per-call cost negligible).
    w1c = w1.astype(jnp.bfloat16)                                  # [F, H]
    w2c = jnp.concatenate([wsg, wsp], axis=1).astype(jnp.bfloat16)  # [H, Fo+S]
    b2 = jnp.concatenate([bsg, bsp], axis=1)                        # [1, Fo+S] f32

    # Batch tile: big enough to amortise the ~0.35us per-grid-step overhead,
    # but keep >= 4 grid steps where possible so the "parallel" axis can shard
    # across TensorCores on v7x.  Multiple of 16 for bf16 sublane packing.
    if B <= 16:
        tb = B
    else:
        tb = min(block_rows, max(16, (B // 4) // 16 * 16), B)
    grid = (pl.cdiv(B, tb),)

    cost = pl.CostEstimate(
        flops=2 * B * F * H + 2 * B * H * (Fo + S),
        transcendentals=B * (H + Fo + S),
        bytes_accessed=(B * F * 4                      # x (f32 in)
                        + B * (Fo + S) * 4             # outputs (f32)
                        + F * H * 2 + H * (Fo + S) * 2  # bf16 weights
                        + (H + Fo + S) * 4),           # f32 biases
    )

    kernel = functools.partial(_sym_decoder_kernel, fo=Fo, act_dtype=act_dtype)

    return pl.pallas_call(
        kernel,
        out_shape=(jax.ShapeDtypeStruct((B, Fo), jnp.float32),
                   jax.ShapeDtypeStruct((B, S), jnp.float32)),
        grid_spec=pltpu.PrefetchScalarGridSpec(
            num_scalar_prefetch=0,
            grid=grid,
            in_specs=[
                pl.BlockSpec((tb, F), lambda i: (i, 0)),       # x: batch-tiled
                pl.BlockSpec((F, H), lambda i: (0, 0)),        # weights/biases
                pl.BlockSpec((1, H), lambda i: (0, 0)),        # stay VMEM-
                pl.BlockSpec((H, Fo + S), lambda i: (0, 0)),   # resident
                pl.BlockSpec((1, Fo + S), lambda i: (0, 0)),
            ],
            out_specs=[
                pl.BlockSpec((tb, Fo), lambda i: (i, 0)),
                pl.BlockSpec((tb, S), lambda i: (i, 0)),
            ],
        ),
        compiler_params=pltpu.CompilerParams(
            dimension_semantics=("parallel",),       # megacore sharding on v7x
            vmem_limit_bytes=32 * 1024 * 1024,       # conservative for v7x
        ),
        cost_estimate=cost,
    )(x, w1c, b1, w2c, b2)


def sym_decoder(x, w1, b1, wsg, bsg, wsp, bsp, *, block_rows=8192,
                act_dtype=None):
    """SymDecoder forward.

    x:   [B, F]              parent_feature (f32)
    w1:  [F, H], b1:  [1, H]  (self.mlp,    weight pre-transposed)
    wsg: [H, F], bsg: [1, F]  (self.mlp_sg, weight pre-transposed)
    wsp: [H, S], bsp: [1, S]  (self.mlp_sp, weight pre-transposed)
    returns (sym_gen_vector [B, F], sym_param_vector [B, S]), f32.
    """
    if act_dtype is None:
        act_dtype = _default_act_dtype()
    return _sym_decoder_impl(x, w1, b1, wsg, bsg, wsp, bsp,
                             block_rows=block_rows, act_dtype=act_dtype)


if __name__ == "__main__":
    feature_size = 32
    hidden_size = 64
    symmetry_size = 8
    batch = 256   # default tiling -> tb=64, 4 grid steps

    key = jax.random.PRNGKey(0)
    k_x, k_w1, k_b1, k_wsg, k_bsg, k_wsp, k_bsp = jax.random.split(key, 7)

    bound1 = 1.0 / (feature_size ** 0.5)
    bound2 = 1.0 / (hidden_size ** 0.5)

    x = jax.random.normal(k_x, (batch, feature_size), dtype=jnp.float32)
    # Weights stored as [in, out] (PyTorch weight transposed).
    w1 = jax.random.uniform(k_w1, (feature_size, hidden_size),
                            minval=-bound1, maxval=bound1, dtype=jnp.float32)
    b1 = jax.random.uniform(k_b1, (1, hidden_size),
                            minval=-bound1, maxval=bound1, dtype=jnp.float32)
    wsg = jax.random.uniform(k_wsg, (hidden_size, feature_size),
                             minval=-bound2, maxval=bound2, dtype=jnp.float32)
    bsg = jax.random.uniform(k_bsg, (1, feature_size),
                             minval=-bound2, maxval=bound2, dtype=jnp.float32)
    wsp = jax.random.uniform(k_wsp, (hidden_size, symmetry_size),
                             minval=-bound2, maxval=bound2, dtype=jnp.float32)
    bsp = jax.random.uniform(k_bsp, (1, symmetry_size),
                             minval=-bound2, maxval=bound2, dtype=jnp.float32)

    sym_gen, sym_param = sym_decoder(x, w1, b1, wsg, bsg, wsp, bsp)
    sym_gen, sym_param = jax.block_until_ready((sym_gen, sym_param))

    # Pure-JAX f32 reference of the SymDecoder forward semantics (tolerance
    # accounts for the kernel's bf16 MXU operands / optional bf16 tanh).
    h_ref = jnp.tanh(x @ w1 + b1)
    ref_sg = jnp.tanh(h_ref @ wsg + bsg)
    ref_sp = jnp.tanh(h_ref @ wsp + bsp)

    assert sym_gen.shape == (batch, feature_size)
    assert sym_param.shape == (batch, symmetry_size)
    assert jnp.allclose(sym_gen, ref_sg, atol=2e-2, rtol=2e-2)
    assert jnp.allclose(sym_param, ref_sp, atol=2e-2, rtol=2e-2)

    print("KERNEL_OK")
</pallas_src>

<mosaic_0001>
module attributes {stable_mosaic.version = 11 : i64} {
  func.func @_sym_decoder_kernel(%arg0: i32, %arg1: memref<64x32xf32, #tpu.memory_space<vmem>>, %arg2: memref<32x64xbf16, #tpu.memory_space<vmem>>, %arg3: memref<1x64xf32, #tpu.memory_space<vmem>>, %arg4: memref<64x40xbf16, #tpu.memory_space<vmem>>, %arg5: memref<1x40xf32, #tpu.memory_space<vmem>>, %arg6: memref<64x32xf32, #tpu.memory_space<vmem>>, %arg7: memref<64x8xf32, #tpu.memory_space<vmem>>) attributes {dimension_semantics = [#tpu.dimension_semantics<parallel>], iteration_bounds = array<i64: 4>, scalar_prefetch = 0 : i64, scratch_operands = 0 : i64, tpu.core_type = #tpu.core_type<tc>, window_params = [{transform_indices = @transform_0, window_bounds = array<i64: 64, 32>}, {pipeline_mode = #tpu.pipeline_mode<synchronous>, transform_indices = @transform_1, window_bounds = array<i64: 32, 64>}, {pipeline_mode = #tpu.pipeline_mode<synchronous>, transform_indices = @transform_2, window_bounds = array<i64: 1, 64>}, {pipeline_mode = #tpu.pipeline_mode<synchronous>, transform_indices = @transform_3, window_bounds = array<i64: 64, 40>}, {pipeline_mode = #tpu.pipeline_mode<synchronous>, transform_indices = @transform_4, window_bounds = array<i64: 1, 40>}, {transform_indices = @transform_5, window_bounds = array<i64: 64, 32>}, {transform_indices = @transform_6, window_bounds = array<i64: 64, 8>}]} {
    %c0 = arith.constant 0 : index
    %c0_0 = arith.constant 0 : index
    %0 = vector.load %arg1[%c0, %c0_0] : memref<64x32xf32, #tpu.memory_space<vmem>>, vector<64x32xf32>
    %1 = arith.truncf %0 : vector<64x32xf32> to vector<64x32xbf16>
    %c0_1 = arith.constant 0 : index
    %c0_2 = arith.constant 0 : index
    %2 = vector.load %arg2[%c0_1, %c0_2] : memref<32x64xbf16, #tpu.memory_space<vmem>>, vector<32x64xbf16>
    %cst = arith.constant dense<0.000000e+00> : vector<64x64xf32>
    %3 = tpu.matmul %1, %2, %cst {dimension_numbers = #tpu.dot_dimension_numbers<[1], [0], [0], [1], [0, 0, 1, 1], [], []>} : vector<64x32xbf16>, vector<32x64xbf16>, vector<64x64xf32> -> vector<64x64xf32>
    %c0_3 = arith.constant 0 : index
    %c0_4 = arith.constant 0 : index
    %4 = vector.load %arg3[%c0_3, %c0_4] : memref<1x64xf32, #tpu.memory_space<vmem>>, vector<1x64xf32>
    %5 = vector.broadcast %4 : vector<1x64xf32> to vector<64x64xf32>
    %6 = arith.addf %3, %5 : vector<64x64xf32>
    %7 = arith.truncf %6 : vector<64x64xf32> to vector<64x64xbf16>
    %8 = math.tanh %7 : vector<64x64xbf16>
    %c0_5 = arith.constant 0 : index
    %c0_6 = arith.constant 0 : index
    %9 = vector.load %arg4[%c0_5, %c0_6] : memref<64x40xbf16, #tpu.memory_space<vmem>>, vector<64x40xbf16>
    %cst_7 = arith.constant dense<0.000000e+00> : vector<64x40xf32>
    %10 = tpu.matmul %8, %9, %cst_7 {dimension_numbers = #tpu.dot_dimension_numbers<[1], [0], [0], [1], [0, 0, 1, 1], [], []>} : vector<64x64xbf16>, vector<64x40xbf16>, vector<64x40xf32> -> vector<64x40xf32>
    %c0_8 = arith.constant 0 : index
    %c0_9 = arith.constant 0 : index
    %11 = vector.load %arg5[%c0_8, %c0_9] : memref<1x40xf32, #tpu.memory_space<vmem>>, vector<1x40xf32>
    %12 = vector.broadcast %11 : vector<1x40xf32> to vector<64x40xf32>
    %13 = arith.addf %10, %12 : vector<64x40xf32>
    %14 = arith.truncf %13 : vector<64x40xf32> to vector<64x40xbf16>
    %15 = math.tanh %14 : vector<64x40xbf16>
    %16 = vector.extract_strided_slice %15 {offsets = [0, 0], sizes = [64, 32], strides = [1, 1]} : vector<64x40xbf16> to vector<64x32xbf16>
    %17 = arith.extf %16 : vector<64x32xbf16> to vector<64x32xf32>
    %c0_10 = arith.constant 0 : index
    %c0_11 = arith.constant 0 : index
    %18 = vector.load %arg6[%c0_10, %c0_11] : memref<64x32xf32, #tpu.memory_space<vmem>>, vector<64x32xf32>
    tpu.vector_store %arg6[%c0_10, %c0_11], %17 {strides = array<i32>} : memref<64x32xf32, #tpu.memory_space<vmem>>, vector<64x32xf32>,
    %19 = vector.extract_strided_slice %15 {offsets = [0, 32], sizes = [64, 8], strides = [1, 1]} : vector<64x40xbf16> to vector<64x8xbf16>
    %20 = arith.extf %19 : vector<64x8xbf16> to vector<64x8xf32>
    %c0_12 = arith.constant 0 : index
    %c0_13 = arith.constant 0 : index
    %21 = vector.load %arg7[%c0_12, %c0_13] : memref<64x8xf32, #tpu.memory_space<vmem>>, vector<64x8xf32>
    tpu.vector_store %arg7[%c0_12, %c0_13], %20 {strides = array<i32>} : memref<64x8xf32, #tpu.memory_space<vmem>>, vector<64x8xf32>,
    return
  }
  func.func @transform_0(%arg0: i32) -> (i32, i32) {
    %c0_i32 = arith.constant 0 : i32
    %c0_i32_0 = arith.constant 0 : i32
    return %arg0, %c0_i32 : i32, i32
  }
  func.func @transform_1(%arg0: i32) -> (i32, i32) {
    %c0_i32 = arith.constant 0 : i32
    %c0_i32_0 = arith.constant 0 : i32
    %c0_i32_1 = arith.constant 0 : i32
    return %c0_i32, %c0_i32_0 : i32, i32
  }
  func.func @transform_2(%arg0: i32) -> (i32, i32) {
    %c0_i32 = arith.constant 0 : i32
    %c0_i32_0 = arith.constant 0 : i32
    %c0_i32_1 = arith.constant 0 : i32
    return %c0_i32, %c0_i32_0 : i32, i32
  }
  func.func @transform_3(%arg0: i32) -> (i32, i32) {
    %c0_i32 = arith.constant 0 : i32
    %c0_i32_0 = arith.constant 0 : i32
    %c0_i32_1 = arith.constant 0 : i32
    return %c0_i32, %c0_i32_0 : i32, i32
  }
  func.func @transform_4(%arg0: i32) -> (i32, i32) {
    %c0_i32 = arith.constant 0 : i32
    %c0_i32_0 = arith.constant 0 : i32
    %c0_i32_1 = arith.constant 0 : i32
    return %c0_i32, %c0_i32_0 : i32, i32
  }
  func.func @transform_5(%arg0: i32) -> (i32, i32) {
    %c0_i32 = arith.constant 0 : i32
    %c0_i32_0 = arith.constant 0 : i32
    return %arg0, %c0_i32 : i32, i32
  }
  func.func @transform_6(%arg0: i32) -> (i32, i32) {
    %c0_i32 = arith.constant 0 : i32
    %c0_i32_0 = arith.constant 0 : i32
    return %arg0, %c0_i32 : i32, i32
  }
}

</mosaic_0001>

<llo_original>
// kernel: _sym_decoder_impl.1
$region0: #{_sym_decoder_impl.1}
  #allocation0 [shape = 'u32[]', space=smem, size = 0x4, offset = 0x4, fixed_abs, tag = 'smem constant byte address 0x4 - core index']
  #allocation1 [shape = 'u32[144,128]{1,0:T(1,128)}', space=vmem, size = 0x12000, scoped, tag = 'internal scratch']
  %s0 = inlined_call_operand.vmem [shape: f32[256,32], index: 0, kind: input, shape index: {}]
  %s1 = inlined_call_operand.vmem [shape: bf16[32,64], index: 1, kind: input, shape index: {}]
  %s2 = inlined_call_operand.vmem [shape: f32[1,64], index: 2, kind: input, shape index: {}]
  %s3 = inlined_call_operand.vmem [shape: bf16[64,40], index: 3, kind: input, shape index: {}]
  %s4 = inlined_call_operand.vmem [shape: f32[1,40], index: 4, kind: input, shape index: {}]
  %s5 = inlined_call_operand.vmem [shape: f32[256,32], index: 5, kind: output, shape index: {0}]
  %s6 = inlined_call_operand.vmem [shape: f32[256,8], index: 6, kind: output, shape index: {1}]
  %7 = xla_tuple %s5, %s6
  %s8 = sld [smem:[#allocation0]]
  $region61: #{_sym_decoder_impl.1} parent=0
    _
  %s10 = ssub.s32 1, %s8
  %s11 = scalar_select 0, %s10, %s8
  loop: start=0, step=1, limit=6
  $region2: #{_sym_decoder_impl.1} parent=0 // loop_pre_header
    _
  $region3: #{_sym_decoder_impl.1} parent=0 // loop_header
    %s13 = sphi 0, %s17
    %p14 = scmp.ge.s32.totalorder %s13, 6
    %s23 = sphi 0, %s25
    %s26 = sphi 0, %s23
    %s27 = sphi 0, %s26
    %s43 = sphi 0, %s27
    %s47 = sphi 0, %s47
    %s49 = sphi 0, %s47
    %s50 = sphi 0, %s49
    %s64 = sphi 0, %s50
    %s68 = sphi 0, %s68
    %s70 = sphi 0, %s68
    %s71 = sphi 0, %s70
    %s85 = sphi 0, %s71
    %s89 = sphi 0, %s89
    %s91 = sphi 0, %s89
    %s92 = sphi 0, %s91
    %s106 = sphi 0, %s92
    %s110 = sphi 0, %s110
    %s112 = sphi 0, %s110
    %s113 = sphi 0, %s112
    %s127 = sphi 0, %s113
    %s133 = sphi 0, %s135
    %s136 = sphi 0, %s133
    %s137 = sphi 0, %s136
    %s153 = sphi 0, %s137
    %s159 = sphi 0, %s161
    %s162 = sphi 0, %s159
    %s163 = sphi 0, %s162
    %s179 = sphi 0, %s163
  $region4: #{_sym_decoder_impl.1} parent=0 // loop_header_branch
    %16 = sbr.rel (%p14) target = $region8
  $region5: #{_sym_decoder_impl.1} parent=0 // loop_body
    %s18 = ssub.s32 %s13, 1
    %s19 = ssub.s32 %s13, 2
    %s20 = sadd.s32 %s13, 1
    %s21 = ssub.s32 %s13, %s20
    %p22 = scmp.eq.s32.totalorder %s21, 0
    %s24 = sadd.s32 %s23, 1
    %s25 = scalar_select %p22, %s23, %s24
    %p28 = pneg %p22
    %p29 = scmp.eq.s32.totalorder %s13, 3
    %p30 = por %p28, %p29
    %p31 = scmp.ne.s32.totalorder %s23, %s26
    %p32 = scmp.eq.s32.totalorder %s13, 0
    %p33 = por %p31, %p32
    %p34 = scmp.ne.s32.totalorder %s23, %s26
    %p35 = scmp.eq.s32.totalorder %s18, 3
    %p36 = por %p34, %p35
    %p37 = scmp.ne.s32.totalorder %s26, %s27
    %p38 = scmp.eq.s32.totalorder %s18, 0
    %p39 = por %p37, %p38
    %p40 = scmp.ne.s32.totalorder %s26, %s27
    %p41 = scmp.eq.s32.totalorder %s19, 3
    %p42 = por %p40, %p41
    %p44 = scmp.ne.s32.totalorder %s27, %s43
    %p45 = scmp.eq.s32.totalorder %s19, 0
    %p46 = por %p44, %p45
    %s48 = sadd.s32 %s47, 1
    %p51 = scmp.eq.s32.totalorder %s13, 3
    %p52 = scmp.ne.s32.totalorder %s47, %s49
    %p53 = scmp.eq.s32.totalorder %s13, 0
    %p54 = por %p52, %p53
    %p55 = scmp.ne.s32.totalorder %s47, %s49
    %p56 = scmp.eq.s32.totalorder %s18, 3
    %p57 = por %p55, %p56
    %p58 = scmp.ne.s32.totalorder %s49, %s50
    %p59 = scmp.eq.s32.totalorder %s18, 0
    %p60 = por %p58, %p59
    %p61 = scmp.ne.s32.totalorder %s49, %s50
    %p62 = scmp.eq.s32.totalorder %s19, 3
    %p63 = por %p61, %p62
    %p65 = scmp.ne.s32.totalorder %s50, %s64
    %p66 = scmp.eq.s32.totalorder %s19, 0
    %p67 = por %p65, %p66
    %s69 = sadd.s32 %s68, 1
    %p72 = scmp.eq.s32.totalorder %s13, 3
    %p73 = scmp.ne.s32.totalorder %s68, %s70
    %p74 = scmp.eq.s32.totalorder %s13, 0
    %p75 = por %p73, %p74
    %p76 = scmp.ne.s32.totalorder %s68, %s70
    %p77 = scmp.eq.s32.totalorder %s18, 3
    %p78 = por %p76, %p77
    %p79 = scmp.ne.s32.totalorder %s70, %s71
    %p80 = scmp.eq.s32.totalorder %s18, 0
    %p81 = por %p79, %p80
    %p82 = scmp.ne.s32.totalorder %s70, %s71
    %p83 = scmp.eq.s32.totalorder %s19, 3
    %p84 = por %p82, %p83
    %p86 = scmp.ne.s32.totalorder %s71, %s85
    %p87 = scmp.eq.s32.totalorder %s19, 0
    %p88 = por %p86, %p87
    %s90 = sadd.s32 %s89, 1
    %p93 = scmp.eq.s32.totalorder %s13, 3
    %p94 = scmp.ne.s32.totalorder %s89, %s91
    %p95 = scmp.eq.s32.totalorder %s13, 0
    %p96 = por %p94, %p95
    %p97 = scmp.ne.s32.totalorder %s89, %s91
    %p98 = scmp.eq.s32.totalorder %s18, 3
    %p99 = por %p97, %p98
    %p100 = scmp.ne.s32.totalorder %s91, %s92
    %p101 = scmp.eq.s32.totalorder %s18, 0
    %p102 = por %p100, %p101
    %p103 = scmp.ne.s32.totalorder %s91, %s92
    %p104 = scmp.eq.s32.totalorder %s19, 3
    %p105 = por %p103, %p104
    %p107 = scmp.ne.s32.totalorder %s92, %s106
    %p108 = scmp.eq.s32.totalorder %s19, 0
    %p109 = por %p107, %p108
    %s111 = sadd.s32 %s110, 1
    %p114 = scmp.eq.s32.totalorder %s13, 3
    %p115 = scmp.ne.s32.totalorder %s110, %s112
    %p116 = scmp.eq.s32.totalorder %s13, 0
    %p117 = por %p115, %p116
    %p118 = scmp.ne.s32.totalorder %s110, %s112
    %p119 = scmp.eq.s32.totalorder %s18, 3
    %p120 = por %p118, %p119
    %p121 = scmp.ne.s32.totalorder %s112, %s113
    %p122 = scmp.eq.s32.totalorder %s18, 0
    %p123 = por %p121, %p122
    %p124 = scmp.ne.s32.totalorder %s112, %s113
    %p125 = scmp.eq.s32.totalorder %s19, 3
    %p126 = por %p124, %p125
    %p128 = scmp.ne.s32.totalorder %s113, %s127
    %p129 = scmp.eq.s32.totalorder %s19, 0
    %p130 = por %p128, %p129
    %s131 = ssub.s32 %s13, %s20
    %p132 = scmp.eq.s32.totalorder %s131, 0
    %s134 = sadd.s32 %s133, 1
    %s135 = scalar_select %p132, %s133, %s134
    %p138 = pneg %p132
    %p139 = scmp.eq.s32.totalorder %s13, 3
    %p140 = por %p138, %p139
    %p141 = scmp.ne.s32.totalorder %s133, %s136
    %p142 = scmp.eq.s32.totalorder %s13, 0
    %p143 = por %p141, %p142
    %p144 = scmp.ne.s32.totalorder %s133, %s136
    %p145 = scmp.eq.s32.totalorder %s18, 3
    %p146 = por %p144, %p145
    %p147 = scmp.ne.s32.totalorder %s136, %s137
    %p148 = scmp.eq.s32.totalorder %s18, 0
    %p149 = por %p147, %p148
    %p150 = scmp.ne.s32.totalorder %s136, %s137
    %p151 = scmp.eq.s32.totalorder %s19, 3
    %p152 = por %p150, %p151
    %p154 = scmp.ne.s32.totalorder %s137, %s153
    %p155 = scmp.eq.s32.totalorder %s19, 0
    %p156 = por %p154, %p155
    %s157 = ssub.s32 %s13, %s20
    %p158 = scmp.eq.s32.totalorder %s157, 0
    %s160 = sadd.s32 %s159, 1
    %s161 = scalar_select %p158, %s159, %s160
    %p164 = pneg %p158
    %p165 = scmp.eq.s32.totalorder %s13, 3
    %p166 = por %p164, %p165
    %p167 = scmp.ne.s32.totalorder %s159, %s162
    %p168 = scmp.eq.s32.totalorder %s13, 0
    %p169 = por %p167, %p168
    %p170 = scmp.ne.s32.totalorder %s159, %s162
    %p171 = scmp.eq.s32.totalorder %s18, 3
    %p172 = por %p170, %p171
    %p173 = scmp.ne.s32.totalorder %s162, %s163
    %p174 = scmp.eq.s32.totalorder %s18, 0
    %p175 = por %p173, %p174
    %p176 = scmp.ne.s32.totalorder %s162, %s163
    %p177 = scmp.eq.s32.totalorder %s19, 3
    %p178 = por %p176, %p177
    %p180 = scmp.ne.s32.totalorder %s163, %s179
    %p181 = scmp.eq.s32.totalorder %s19, 0
    %p182 = por %p180, %p181
    %p183 = scmp.le.s32.totalorder 1, %s13
    %p184 = scmp.lt.s32.totalorder %s13, 5
    %p185 = pnand %p183, %p184
    %p186 = pneg %p185
    // Predicated region
    $region9: #{_sym_decoder_impl.1} parent=5 // pred_check
      _
    $region10: #{_sym_decoder_impl.1} parent=5 // pred_check_branch
      %188 = sbr.rel (%p185) target = $region12
    $region11: #{_sym_decoder_impl.1} parent=5 // pred_region
      %s189 = ssub.s32 %s13, 1
      // Predicated region
      $region13: #{_sym_decoder_impl.1} parent=11 // pred_check
        %p190 = pneg %p60
      $region14: #{_sym_decoder_impl.1} parent=11 // pred_check_branch
        %192 = sbr.rel (%p190) target = $region16
      $region15: #{_sym_decoder_impl.1} parent=11 // pred_region
        _
      $region16: #{_sym_decoder_impl.1} parent=11 // pred_fallthru
        _
      // Predicated region
      $region17: #{_sym_decoder_impl.1} parent=11 // pred_check
        %p193 = pneg %p81
      $region18: #{_sym_decoder_impl.1} parent=11 // pred_check_branch
        %195 = sbr.rel (%p193) target = $region20
      $region19: #{_sym_decoder_impl.1} parent=11 // pred_region
        _
      $region20: #{_sym_decoder_impl.1} parent=11 // pred_fallthru
        _
      // Predicated region
      $region21: #{_sym_decoder_impl.1} parent=11 // pred_check
        %p196 = pneg %p102
      $region22: #{_sym_decoder_impl.1} parent=11 // pred_check_branch
        %198 = sbr.rel (%p196) target = $region24
      $region23: #{_sym_decoder_impl.1} parent=11 // pred_region
        _
      $region24: #{_sym_decoder_impl.1} parent=11 // pred_fallthru
        _
      // Predicated region
      $region25: #{_sym_decoder_impl.1} parent=11 // pred_check
        %p199 = pneg %p123
      $region26: #{_sym_decoder_impl.1} parent=11 // pred_check_branch
        %201 = sbr.rel (%p199) target = $region28
      $region27: #{_sym_decoder_impl.1} parent=11 // pred_region
        _
      $region28: #{_sym_decoder_impl.1} parent=11 // pred_fallthru
        _
    $region12: #{_sym_decoder_impl.1} parent=5 // pred_fallthru
      _
    %p202 = scmp.lt.s32.totalorder %s13, 4
    // Predicated region
    $region29: #{_sym_decoder_impl.1} parent=5 // pred_check
      %p203 = pneg %p202
    $region30: #{_sym_decoder_impl.1} parent=5 // pred_check_branch
      %205 = sbr.rel (%p203) target = $region32
    $region31: #{_sym_decoder_impl.1} parent=5 // pred_region
      // Predicated region
      $region33: #{_sym_decoder_impl.1} parent=31 // pred_check
        %p206 = pneg %p33
      $region34: #{_sym_decoder_impl.1} parent=31 // pred_check_branch
        %208 = sbr.rel (%p206) target = $region36
      $region35: #{_sym_decoder_impl.1} parent=31 // pred_region
        %s209 = smul.u32 8, %s13
        %p210 = scmp.lt.s32.totalorder %s209, 31
        %s211 = scalar_select %p210, %s209, 31
        %s212 = smul.addr %s211, 8
        %s213 = scalar_lea.vmem %s0, %s212
        %s214 = smul.u32 8, %s13
      $region36: #{_sym_decoder_impl.1} parent=31 // pred_fallthru
        _
    $region32: #{_sym_decoder_impl.1} parent=5 // pred_fallthru
      _
    %p215 = scmp.le.s32.totalorder 1, %s13
    %p216 = scmp.lt.s32.totalorder %s13, 5
    %p217 = pnand %p215, %p216
    %p218 = pneg %p217
    // Predicated region
    $region37: #{_sym_decoder_impl.1} parent=5 // pred_check
      _
    $region38: #{_sym_decoder_impl.1} parent=5 // pred_check_branch
      %220 = sbr.rel (%p217) target = $region40
    $region39: #{_sym_decoder_impl.1} parent=5 // pred_region
      %s221 = ssub.s32 %s13, 1
      %s222 = smul.u32 8, %s18
      %p223 = scmp.lt.s32.totalorder %s222, 31
      %s224 = scalar_select %p223, %s222, 31
      %s225 = smul.addr %s224, 8
      %s226 = scalar_lea.vmem %s0, %s225
      %p227 = pneg %p39
      %p228 = pneg %p36
      %p229 = pneg %p60
      %p230 = pneg %p57
      %p231 = pneg %p81
      %p232 = pneg %p78
      %p233 = pneg %p102
      %p234 = pneg %p99
      %p235 = pneg %p123
      %p236 = pneg %p120
      %p237 = pneg %p149
      %p238 = pneg %p146
      %s239 = smul.u32 8, %s18
      %p240 = scmp.lt.s32.totalorder %s239, 31
      %s241 = scalar_select %p240, %s239, 31
      %s242 = smul.addr %s241, 8
      %s243 = scalar_lea.vmem %s5, %s242
      %p244 = pneg %p175
      %p245 = pneg %p172
      %s246 = smul.u32 8, %s18
      %p247 = scmp.lt.s32.totalorder %s246, 31
      %s248 = scalar_select %p247, %s246, 31
      %s249 = smul.addr %s248, 8
      %s250 = scalar_lea.vmem %s6, %s249
      %s251 = smul.u32 8, %s18
      %p252 = scmp.lt.s32.totalorder %s251, 31
      %s253 = scalar_select %p252, %s251, 31
      %s254 = smul.addr %s253, 8
      %s255 = scalar_lea.vmem %s0, %s254
      %s256 = smul.u32 8, %s18
      %s257 = smul.u32 8, %s18
      %p258 = scmp.lt.s32.totalorder %s257, 31
      %s259 = scalar_select %p258, %s257, 31
      %s260 = smul.addr %s259, 8
      %s261 = scalar_lea.vmem %s5, %s260
      %s262 = smul.u32 8, %s18
      %s263 = smul.u32 8, %s18
      %p264 = scmp.lt.s32.totalorder %s263, 31
      %s265 = scalar_select %p264, %s263, 31
      %s266 = smul.addr %s265, 8
      %s267 = scalar_lea.vmem %s6, %s266
      %s268 = smul.u32 8, %s18
      %v270 = vld [vmem:[%s255] sm:$0xff]
      %v271 = vld [vmem:[%s255 + $0x8] sm:$0xff]
      %v272 = vld [vmem:[%s255 + $0x10] sm:$0xff]
      %v273 = vld [vmem:[%s255 + $0x18] sm:$0xff]
      %v274 = vld [vmem:[%s255 + $0x20] sm:$0xff]
      %v275 = vld [vmem:[%s255 + $0x28] sm:$0xff]
      %v276 = vld [vmem:[%s255 + $0x30] sm:$0xff]
      %v277 = vld [vmem:[%s255 + $0x38] sm:$0xff]
      %v278 = vpack.c.bf16 %v271, %v270
      %v279 = vpack.c.bf16 %v273, %v272
      %v280 = vpack.c.bf16 %v275, %v274
      %v281 = vpack.c.bf16 %v277, %v276
      %v282 = vld [vmem:[%s1] sm:$0xf]
      %v283 = vld [vmem:[%s1 + $0x4] sm:$0xf]
      %v284 = vld [vmem:[%s1 + $0x8] sm:$0xf]
      %v285 = vld [vmem:[%s1 + $0xc] sm:$0xf]
      %v286 = vld [vmem:[%s2] sm:$0x1]
      %v288 = vlaneseq
      %v289 = vshrl.u32 %v288, 7
      %v290 = vsub.s32 0, %v289
      %v291 = vrot.slane %v286, %v290
      %v297 = vunpack.c.l.b16 %v282
      %v298 = vunpack.c.l.b16 %v283
      %v299 = vunpack.c.l.b16 %v284
      %v300 = vunpack.c.l.b16 %v285
      %v301 = vpack.c.b16 %v298, %v297
      %v302 = vpack.c.b16 %v300, %v299
      %vm305 = vcmask 261120
      %v307 = vsel %vm305, %v278, 0
      %v310 = vsel %vm305, %v279, 0
      %v313 = vsel %vm305, %v280, 0
      %v316 = vsel %vm305, %v281, 0
      %318 = vmatprep.subr.bf16.mxu0 0
      %319 = vmatpush1.bf16.msra.mxu0 %v301
      %320 = vmatprep.subr.bf16.mxu0 0
      %321 = vmatpush1.bf16.msra.mxu0 %v302
      %322 = vmatprep.subr.bf16.mxu0 0
      %323 = vmatpush1.bf16.msra.mxu0 0
      %324 = vmatprep.subr.bf16.mxu0 0
      %325 = vmatpush1.bf16.msra.mxu0 0
      %326 = vmatprep.subr.bf16.mxu0 0
      %327 = vmatpush1.bf16.msra.mxu0 0
      %328 = vmatprep.subr.bf16.mxu0 0
      %329 = vmatpush1.bf16.msra.mxu0 0
      %330 = vmatprep.subr.bf16.mxu0 0
      %331 = vmatpush1.bf16.msra.mxu0 0
      %332 = vmatprep.subr.bf16.mxu0 0
      %333 = vmatpush1.bf16.msra.mxu0 0
      %334 = vmatprep.subr.bf16.mxu0 0
      %335 = vmatpush1.bf16.msra.mxu0 0
      %336 = vmatprep.subr.bf16.mxu0 0
      %337 = vmatpush1.bf16.msra.mxu0 0
      %338 = vmatprep.subr.bf16.mxu0 0
      %339 = vmatpush1.bf16.msra.mxu0 0
      %340 = vmatprep.subr.bf16.mxu0 0
      %341 = vmatpush1.bf16.msra.mxu0 0
      %342 = vmatprep.subr.bf16.mxu0 0
      %343 = vmatpush1.bf16.msra.mxu0 0
      %344 = vmatprep.subr.bf16.mxu0 0
      %345 = vmatpush1.bf16.msra.mxu0 0
      %346 = vmatprep.subr.bf16.mxu0 0
      %347 = vmatpush1.bf16.msra.mxu0 0
      %348 = vmatprep.subr.bf16.mxu0 0
      %349 = vmatpush1.bf16.msra.mxu0 0
      %350 = vmatprep.mubr.bf16.mxu0 0
      %351 = vmatmul.mubr.bf16.gmra.mrb[0].mxu0 %v307
      %v352 = vpop.f32.mrb[0].mxu0
      %v353 = vadd.f32 %v291, %v352
      %v354 = vpop.f32.mrb[0].mxu0
      %v355 = vpop.f32.mrb[0].mxu0
      %v356 = vadd.f32 %v291, %v355
      %v357 = vpop.f32.mrb[0].mxu0
      %358 = vmatprep.mubr.bf16.mxu0 0
      %359 = vmatmul.mubr.bf16.gmra.mrb[0].mxu0 %v310
      %v360 = vpop.f32.mrb[0].mxu0
      %v361 = vadd.f32 %v291, %v360
      %v362 = vpop.f32.mrb[0].mxu0
      %v363 = vpop.f32.mrb[0].mxu0
      %v364 = vadd.f32 %v291, %v363
      %v365 = vpop.f32.mrb[0].mxu0
      %366 = vmatprep.mubr.bf16.mxu0 0
      %367 = vmatmul.mubr.bf16.gmra.mrb[0].mxu0 %v313
      %v368 = vpop.f32.mrb[0].mxu0
      %v369 = vadd.f32 %v291, %v368
      %v370 = vpop.f32.mrb[0].mxu0
      %v371 = vpop.f32.mrb[0].mxu0
      %v372 = vadd.f32 %v291, %v371
      %v373 = vpop.f32.mrb[0].mxu0
      %374 = vmatprep.mubr.bf16.mxu0 0
      %375 = vmatmul.mubr.bf16.gmra.mrb[0].mxu0 %v316
      %v376 = vpop.f32.mrb[0].mxu0
      %v377 = vadd.f32 %v291, %v376
      %v378 = vpop.f32.mrb[0].mxu0
      %v379 = vpop.f32.mrb[0].mxu0
      %v380 = vadd.f32 %v291, %v379
      %v381 = vpop.f32.mrb[0].mxu0
      %382 = vdwg.mxu0
      %v383 = vpack.c.bf16 %v356, %v353
      %v384 = vpack.c.bf16 %v364, %v361
      %v385 = vpack.c.bf16 %v372, %v369
      %v386 = vpack.c.bf16 %v380, %v377
      %v387 = vtanh.bf16.pop %v383
      %v388 = vtanh.bf16.pop %v384
      %v389 = vtanh.bf16.pop %v385
      %v390 = vtanh.bf16.pop %v386
      %v391 = vld [vmem:[%s3] sm:$0xf]
      %v392 = vld [vmem:[%s3 + $0x4] sm:$0xf]
      %v393 = vld [vmem:[%s3 + $0x8] sm:$0xf]
      %v394 = vld [vmem:[%s3 + $0xc] sm:$0xf]
      %v395 = vld [vmem:[%s3 + $0x10] sm:$0xf]
      %v396 = vld [vmem:[%s3 + $0x14] sm:$0xf]
      %v397 = vld [vmem:[%s3 + $0x18] sm:$0xf]
      %v398 = vld [vmem:[%s3 + $0x1c] sm:$0xf]
      %v399 = vld [vmem:[%s4] sm:$0x1]
      %v401 = vlaneseq
      %v402 = vshrl.u32 %v401, 7
      %v403 = vsub.s32 0, %v402
      %v404 = vrot.slane %v399, %v403
      %v414 = vunpack.c.l.b16 %v391
      %v415 = vunpack.c.l.b16 %v392
      %v416 = vunpack.c.l.b16 %v393
      %v417 = vunpack.c.l.b16 %v394
      %v418 = vunpack.c.l.b16 %v395
      %v419 = vunpack.c.l.b16 %v396
      %v420 = vunpack.c.l.b16 %v397
      %v421 = vunpack.c.l.b16 %v398
      %v422 = vpack.c.b16 %v415, %v414
      %v423 = vpack.c.b16 %v417, %v416
      %v424 = vpack.c.b16 %v419, %v418
      %v425 = vpack.c.b16 %v421, %v420
      %vm430 = vcmask 523264
      %v432 = vsel %vm430, %v387, 0
      %v435 = vsel %vm430, %v388, 0
      %v438 = vsel %vm430, %v389, 0
      %v441 = vsel %vm430, %v390, 0
      %443 = vmatprep.subr.bf16.mxu0 0
      %444 = vmatpush1.bf16.msra.mxu0 %v422
      %445 = vmatprep.subr.bf16.mxu0 0
      %446 = vmatpush1.bf16.msra.mxu0 %v423
      %447 = vmatprep.subr.bf16.mxu0 0
      %448 = vmatpush1.bf16.msra.mxu0 %v424
      %449 = vmatprep.subr.bf16.mxu0 0
      %450 = vmatpush1.bf16.msra.mxu0 %v425
      %451 = vmatprep.subr.bf16.mxu0 0
      %452 = vmatpush1.bf16.msra.mxu0 0
      %453 = vmatprep.subr.bf16.mxu0 0
      %454 = vmatpush1.bf16.msra.mxu0 0
      %455 = vmatprep.subr.bf16.mxu0 0
      %456 = vmatpush1.bf16.msra.mxu0 0
      %457 = vmatprep.subr.bf16.mxu0 0
      %458 = vmatpush1.bf16.msra.mxu0 0
      %459 = vmatprep.subr.bf16.mxu0 0
      %460 = vmatpush1.bf16.msra.mxu0 0
      %461 = vmatprep.subr.bf16.mxu0 0
      %462 = vmatpush1.bf16.msra.mxu0 0
      %463 = vmatprep.subr.bf16.mxu0 0
      %464 = vmatpush1.bf16.msra.mxu0 0
      %465 = vmatprep.subr.bf16.mxu0 0
      %466 = vmatpush1.bf16.msra.mxu0 0
      %467 = vmatprep.subr.bf16.mxu0 0
      %468 = vmatpush1.bf16.msra.mxu0 0
      %469 = vmatprep.subr.bf16.mxu0 0
      %470 = vmatpush1.bf16.msra.mxu0 0
      %471 = vmatprep.subr.bf16.mxu0 0
      %472 = vmatpush1.bf16.msra.mxu0 0
      %473 = vmatprep.subr.bf16.mxu0 0
      %474 = vmatpush1.bf16.msra.mxu0 0
      %475 = vmatprep.mubr.bf16.mxu0 0
      %476 = vmatmul.mubr.bf16.gmra.mrb[0].mxu0 %v432
      %v477 = vpop.f32.mrb[0].mxu0
      %v478 = vadd.f32 %v404, %v477
      %v479 = vpop.f32.mrb[0].mxu0
      %v480 = vpop.f32.mrb[0].mxu0
      %v481 = vadd.f32 %v404, %v480
      %v482 = vpop.f32.mrb[0].mxu0
      %483 = vmatprep.mubr.bf16.mxu0 0
      %484 = vmatmul.mubr.bf16.gmra.mrb[0].mxu0 %v435
      %v485 = vpop.f32.mrb[0].mxu0
      %v486 = vadd.f32 %v404, %v485
      %v487 = vpop.f32.mrb[0].mxu0
      %v488 = vpop.f32.mrb[0].mxu0
      %v489 = vadd.f32 %v404, %v488
      %v490 = vpop.f32.mrb[0].mxu0
      %491 = vmatprep.mubr.bf16.mxu0 0
      %492 = vmatmul.mubr.bf16.gmra.mrb[0].mxu0 %v438
      %v493 = vpop.f32.mrb[0].mxu0
      %v494 = vadd.f32 %v404, %v493
      %v495 = vpop.f32.mrb[0].mxu0
      %v496 = vpop.f32.mrb[0].mxu0
      %v497 = vadd.f32 %v404, %v496
      %v498 = vpop.f32.mrb[0].mxu0
      %499 = vmatprep.mubr.bf16.mxu0 0
      %500 = vmatmul.mubr.bf16.gmra.mrb[0].mxu0 %v441
      %v501 = vpop.f32.mrb[0].mxu0
      %v502 = vadd.f32 %v404, %v501
      %v503 = vpop.f32.mrb[0].mxu0
      %v504 = vpop.f32.mrb[0].mxu0
      %v505 = vadd.f32 %v404, %v504
      %v506 = vpop.f32.mrb[0].mxu0
      %507 = vdwg.mxu0
      %v508 = vpack.c.bf16 %v481, %v478
      %v509 = vpack.c.bf16 %v489, %v486
      %v510 = vpack.c.bf16 %v497, %v494
      %v511 = vpack.c.bf16 %v505, %v502
      %v512 = vtanh.bf16.pop %v508
      %v513 = vtanh.bf16.pop %v509
      %v514 = vtanh.bf16.pop %v510
      %v515 = vtanh.bf16.pop %v511
      %v516 = vunpack.c.l.bf16 %v512
      %v517 = vunpack.c.h.bf16 %v512
      %v518 = vunpack.c.l.bf16 %v513
      %v519 = vunpack.c.h.bf16 %v513
      %v520 = vunpack.c.l.bf16 %v514
      %v521 = vunpack.c.h.bf16 %v514
      %v522 = vunpack.c.l.bf16 %v515
      %v523 = vunpack.c.h.bf16 %v515
      %524 = vst.msk [vmem:[%s261] sm:$0xff] %vm305, %v516
      %525 = vst.msk [vmem:[%s261 + $0x8] sm:$0xff] %vm305, %v517
      %526 = vst.msk [vmem:[%s261 + $0x10] sm:$0xff] %vm305, %v518
      %527 = vst.msk [vmem:[%s261 + $0x18] sm:$0xff] %vm305, %v519
      %528 = vst.msk [vmem:[%s261 + $0x20] sm:$0xff] %vm305, %v520
      %529 = vst.msk [vmem:[%s261 + $0x28] sm:$0xff] %vm305, %v521
      %530 = vst.msk [vmem:[%s261 + $0x30] sm:$0xff] %vm305, %v522
      %531 = vst.msk [vmem:[%s261 + $0x38] sm:$0xff] %vm305, %v523
      %540 = vrot.lane.b32.xlu0 %v516, 96
      %v541 = vpop.permute.xlu0 %540
      %542 = vrot.lane.b32.xlu0 %v517, 96
      %v543 = vpop.permute.xlu0 %542
      %544 = vrot.lane.b32.xlu0 %v518, 96
      %v545 = vpop.permute.xlu0 %544
      %546 = vrot.lane.b32.xlu0 %v519, 96
      %v547 = vpop.permute.xlu0 %546
      %548 = vrot.lane.b32.xlu0 %v520, 96
      %v549 = vpop.permute.xlu0 %548
      %550 = vrot.lane.b32.xlu0 %v521, 96
      %v551 = vpop.permute.xlu0 %550
      %552 = vrot.lane.b32.xlu0 %v522, 96
      %v553 = vpop.permute.xlu0 %552
      %554 = vrot.lane.b32.xlu0 %v523, 96
      %v555 = vpop.permute.xlu0 %554
      %vm564 = vcmask 64512
      %565 = vst.msk [vmem:[%s267] sm:$0xff] %vm564, %v541
      %566 = vst.msk [vmem:[%s267 + $0x8] sm:$0xff] %vm564, %v543
      %567 = vst.msk [vmem:[%s267 + $0x10] sm:$0xff] %vm564, %v545
      %568 = vst.msk [vmem:[%s267 + $0x18] sm:$0xff] %vm564, %v547
      %569 = vst.msk [vmem:[%s267 + $0x20] sm:$0xff] %vm564, %v549
      %570 = vst.msk [vmem:[%s267 + $0x28] sm:$0xff] %vm564, %v551
      %571 = vst.msk [vmem:[%s267 + $0x30] sm:$0xff] %vm564, %v553
      %572 = vst.msk [vmem:[%s267 + $0x38] sm:$0xff] %vm564, %v555
      %s573 = smul.u32 8, %s18
      %p574 = scmp.lt.s32.totalorder %s573, 31
      %s575 = scalar_select %p574, %s573, 31
      %s576 = smul.addr %s575, 8
      %s577 = scalar_lea.vmem %s5, %s576
      %s578 = smul.u32 8, %s18
      %p579 = scmp.lt.s32.totalorder %s578, 31
      %s580 = scalar_select %p579, %s578, 31
      %s581 = smul.addr %s580, 8
      %s582 = scalar_lea.vmem %s6, %s581
      // Predicated region
      $region41: #{_sym_decoder_impl.1} parent=39 // pred_check
        %p583 = pneg %p146
      $region42: #{_sym_decoder_impl.1} parent=39 // pred_check_branch
        %585 = sbr.rel (%p583) target = $region44
      $region43: #{_sym_decoder_impl.1} parent=39 // pred_region
        %s586 = smul.u32 8, %s18
      $region44: #{_sym_decoder_impl.1} parent=39 // pred_fallthru
        _
      // Predicated region
      $region45: #{_sym_decoder_impl.1} parent=39 // pred_check
        %p587 = pneg %p172
      $region46: #{_sym_decoder_impl.1} parent=39 // pred_check_branch
        %589 = sbr.rel (%p587) target = $region48
      $region47: #{_sym_decoder_impl.1} parent=39 // pred_region
        %s590 = smul.u32 8, %s18
      $region48: #{_sym_decoder_impl.1} parent=39 // pred_fallthru
        _
    $region40: #{_sym_decoder_impl.1} parent=5 // pred_fallthru
      _
    %p591 = scmp.le.s32.totalorder 2, %s13
    // Predicated region
    $region49: #{_sym_decoder_impl.1} parent=5 // pred_check
      %p592 = pneg %p591
    $region50: #{_sym_decoder_impl.1} parent=5 // pred_check_branch
      %594 = sbr.rel (%p592) target = $region52
    $region51: #{_sym_decoder_impl.1} parent=5 // pred_region
      %s595 = ssub.s32 %s13, 2
      // Predicated region
      $region53: #{_sym_decoder_impl.1} parent=51 // pred_check
        %p596 = pneg %p152
      $region54: #{_sym_decoder_impl.1} parent=51 // pred_check_branch
        %598 = sbr.rel (%p596) target = $region56
      $region55: #{_sym_decoder_impl.1} parent=51 // pred_region
        %s599 = smul.u32 8, %s19
        %p600 = scmp.lt.s32.totalorder %s599, 31
        %s601 = scalar_select %p600, %s599, 31
        %s602 = smul.addr %s601, 8
        %s603 = scalar_lea.vmem %s5, %s602
      $region56: #{_sym_decoder_impl.1} parent=51 // pred_fallthru
        _
      // Predicated region
      $region57: #{_sym_decoder_impl.1} parent=51 // pred_check
        %p604 = pneg %p178
      $region58: #{_sym_decoder_impl.1} parent=51 // pred_check_branch
        %606 = sbr.rel (%p604) target = $region60
      $region59: #{_sym_decoder_impl.1} parent=51 // pred_region
        %s607 = smul.u32 8, %s19
        %p608 = scmp.lt.s32.totalorder %s607, 31
        %s609 = scalar_select %p608, %s607, 31
        %s610 = smul.addr %s609, 8
        %s611 = scalar_lea.vmem %s6, %s610
      $region60: #{_sym_decoder_impl.1} parent=51 // pred_fallthru
        _
    $region52: #{_sym_decoder_impl.1} parent=5 // pred_fallthru
      _
  $region6: #{_sym_decoder_impl.1} parent=0 // loop_footer
    %s17 = sadd.s32 1, %s13
  $region7: #{_sym_decoder_impl.1} parent=0 // loop_footer_branch
    %12 = sbr.rel target = $region3
  $region8: #{_sym_decoder_impl.1} parent=0 // loop_exit
    _

</llo_original>
